<compile_context>
chip_gen: v5e
topology: v5e:2x2
jax: 0.10.0
libtpu: 0.0.40
codegen_flags: <defaults>
</compile_context>

<pallas_src>
import functools

import jax
import jax.numpy as jnp
from jax.experimental import pallas as pl
from jax.experimental.pallas import tpu as pltpu

_MIB = 1024 * 1024


def _cossin_kernel(x_ref, w_ref, b_ref, expand_ref, basis_ref,
                   cos_out_ref, sin_out_ref, w_scratch):
    """Grid step == (one block of Bb batch elements, one D*D lane strip)."""

    @pl.when(pl.program_id(1) == 0)
    def _compute_attention_weights():
        x = x_ref[...]                                   # (Bb, N, D)
        Bb, N, D = x.shape
        Dp = w_ref.shape[1] // 3                         # 128-aligned segment width

        # Fused Q/K/V projection: one (Bb*N, D) @ (D, 3*Dp) MXU matmul.
        # (The reshape is a free reinterpretation when N % 8 == 0; for other N
        # it is still correct, just a relayout copy.)
        proj = jnp.dot(x.reshape(Bb * N, D), w_ref[...],
                       preferred_element_type=jnp.float32) + b_ref[...]
        proj = proj.reshape(Bb, N, 3 * Dp)

        # q_proj(mean_n(x)) == mean_n(q_proj(x))  (bias is constant over n).
        q = jnp.mean(proj[:, :, :D], axis=1)             # (Bb, D)
        k = proj[:, :, Dp:Dp + D]                        # (Bb, N, D)
        v = proj[:, :, 2 * Dp:2 * Dp + D]                # (Bb, N, D)

        # scores[b, n] = <q_b, k_bn> / sqrt(D): VPU multiply + lane reduce.
        inv_sqrt_d = 1.0 / float(D) ** 0.5
        scores = jnp.sum(k * q[:, None, :], axis=-1, keepdims=True) * inv_sqrt_d
        scores = scores - jnp.max(scores, axis=1, keepdims=True)
        e = jnp.exp(scores)
        attn = e / jnp.sum(e, axis=1, keepdims=True)     # softmax over N, (Bb, N, 1)

        # initial_weights = mean_n(attn_n * V_n); cached across strip steps.
        w_scratch[...] = jnp.mean(attn * v, axis=1)      # (Bb, D)

    # Expand w[b, i] across the j-lanes of this strip via the one-hot repeat
    # matrix on the (otherwise idle) MXU: w_exp[b, i*D + j] = w[b, i].  Keeps
    # the output lane-dense (strip is a multiple of 128 or the full D*D).
    w_exp = jnp.dot(w_scratch[...], expand_ref[...],
                    preferred_element_type=jnp.float32)  # (Bb, strip)

    cos_out_ref[...] = (w_exp * basis_ref[0:1, :]).astype(cos_out_ref.dtype)
    sin_out_ref[...] = (w_exp * basis_ref[1:2, :]).astype(sin_out_ref.dtype)


def _vmem_budget_bytes():
    """Generation-aware scoped-VMEM budget (<= physical on every TPU gen)."""
    try:
        phys = int(pltpu.get_tpu_info().vmem_capacity_bytes)
    except Exception:
        phys = 64 * _MIB                     # conservative default (v7x per-core)
    # Cap at 64 MiB: <= the v7x per-core ceiling, and already 2-4x the default
    # scoped limit on v5e/v6e (which is the first thing that breaks otherwise).
    return min((phys * 3) // 4, 64 * _MIB)


def _pick_strip(D, DD, vmem_budget):
    """Width of a D*D lane strip: a multiple of 128 dividing DD (or DD itself),
    keeping the (D, strip) one-hot expand block well inside the VMEM budget."""
    if DD % 128 != 0:
        return DD                            # full width (legal: equals the array dim)
    cap = min(4 * _MIB, vmem_budget // 8)    # per-buffer target for the expand strip
    best = 128
    for s in range(128, DD + 1, 128):
        if DD % s == 0 and D * s * 4 <= cap:
            best = s
    return best


def _pick_block_b(B, N, D, Dp, strip, x_itemsize, vmem_budget):
    """Largest legal batch block whose per-step VMEM fits the budget, preferring
    output DMA blocks in the 512 KiB - 2 MiB sweet spot and >= 4 batch grid
    steps (keeps both v7x TensorCores busy and the DMA pipeline deep)."""

    def vmem_use(bb):
        x_blk = bb * N * D * x_itemsize * 2          # x, double-buffered
        out_blk = 2 * bb * strip * 4 * 2             # cos + sin blocks, double-buffered
        exp_blk = D * strip * 4 * 2                  # one-hot expand strip
        bas_blk = 2 * strip * 4 * 2                  # [cos; sin] basis strip
        w_blk = (D + 1) * 3 * Dp * 4 * 2             # fused weights + bias
        scr = bb * D * 4                             # attention-weight scratch
        return x_blk + out_blk + exp_blk + bas_blk + w_blk + scr

    legal = [c for c in range(1, B + 1) if B % c == 0 and (c % 8 == 0 or c == B)]
    cands = [c for c in legal if vmem_use(c) <= vmem_budget]
    if not cands:
        return min(legal)                            # pathological shapes: smallest legal block

    lo, hi = 512 * 1024, 2 * _MIB

    def key(c):
        ob = c * strip * 4                           # one output block's bytes
        enough_steps = (B // c) >= 4                 # megacore + pipeline overlap
        in_window = lo <= ob <= hi
        return (enough_steps, in_window, min(ob, hi), -c)

    return max(cands, key=key)


@functools.partial(jax.jit, static_argnames=("single_buffer_invariants",))
def _cosine_sine_basis_impl(x, wq, bq, wk, bk, wv, bv, fcos, pcos, fsin, psin,
                            *, single_buffer_invariants=True):
    B, N, D = x.shape
    DD = D * D
    Dp = ((D + 127) // 128) * 128            # 128-lane-aligned projection segment

    # ---- Batch-invariant precompute, hoisted out of the grid ---------------
    idx = jnp.arange(D, dtype=jnp.float32)
    x_matrix = idx[:, None] - idx[None, :]                          # (D, D): i - j
    cos_mat = jnp.cos(fcos * x_matrix + pcos)                       # (D, D)
    sin_mat = jnp.sin(fsin * x_matrix + psin)                       # (D, D)
    basis = jnp.stack([cos_mat.reshape(DD), sin_mat.reshape(DD)])   # (2, D*D)

    # One-hot repeat matrix: expand[k, i*D + j] = 1.0 iff k == i.
    expand = jnp.repeat(jnp.eye(D, dtype=jnp.float32), D, axis=1)   # (D, D*D)
    # TODO(synk): for very large D the (D, D*D) expand matrix gets big in HBM
    # (D^3 * 4 bytes); switch to an in-kernel sublane broadcast at that point.

    # Fused, lane-aligned [Q | K | V] projection parameters.
    pad = Dp - D
    pad_w = (lambda w: jnp.pad(w, ((0, 0), (0, pad)))) if pad else (lambda w: w)
    w_fused = jnp.concatenate([pad_w(wq), pad_w(wk), pad_w(wv)], axis=1)  # (D, 3*Dp)
    b_fused = jnp.concatenate([pad_w(bq), pad_w(bk), pad_w(bv)], axis=1)  # (1, 3*Dp)

    # ---- Tiling / VMEM budget ----------------------------------------------
    budget = _vmem_budget_bytes()
    strip = _pick_strip(D, DD, budget)
    n_strips = DD // strip
    Bb = _pick_block_b(B, N, D, Dp, strip, x.dtype.itemsize, budget)

    inv = dict(pipeline_mode=pl.Buffered(1)) if single_buffer_invariants else {}
    strip_inv = inv if n_strips == 1 else {}     # expand/basis vary across strips

    cos_flat, sin_flat = pl.pallas_call(
        _cossin_kernel,
        out_shape=(jax.ShapeDtypeStruct((B, DD), jnp.float32),
                   jax.ShapeDtypeStruct((B, DD), jnp.float32)),
        grid=(B // Bb, n_strips),
        in_specs=[
            pl.BlockSpec((Bb, N, D), lambda b, s: (b, 0, 0)),            # x (same block over s)
            pl.BlockSpec((D, 3 * Dp), lambda b, s: (0, 0), **inv),       # [Wq | Wk | Wv]
            pl.BlockSpec((1, 3 * Dp), lambda b, s: (0, 0), **inv),       # [bq | bk | bv]
            pl.BlockSpec((D, strip), lambda b, s: (0, s), **strip_inv),  # one-hot expand strip
            pl.BlockSpec((2, strip), lambda b, s: (0, s), **strip_inv),  # [cos; sin] basis strip
        ],
        out_specs=(pl.BlockSpec((Bb, strip), lambda b, s: (b, s)),
                   pl.BlockSpec((Bb, strip), lambda b, s: (b, s))),
        scratch_shapes=[pltpu.VMEM((Bb, D), jnp.float32)],
        compiler_params=pltpu.CompilerParams(
            dimension_semantics=("parallel", "arbitrary"),
            vmem_limit_bytes=int(budget)),
        # TODO(synk): outputs could be emitted in bfloat16 (halves the HBM-write
        # roofline term) if downstream consumers tolerate reduced precision.
    )(x, w_fused, b_fused, expand, basis)

    return cos_flat.reshape(B, D, D), sin_flat.reshape(B, D, D)


def cosine_sine_basis(x, wq, bq, wk, bk, wv, bv, fcos, pcos, fsin, psin):
    args = (x, wq, bq, wk, bk, wv, bv, fcos, pcos, fsin, psin)
    try:
        return _cosine_sine_basis_impl(*args, single_buffer_invariants=True)
    except Exception:
        # pipeline_mode=pl.Buffered(1) not supported on this JAX build: fall
        # back to default double-buffered invariants (slightly higher VMEM).
        return _cosine_sine_basis_impl(*args, single_buffer_invariants=False)


def _reference(x, wq, bq, wk, bk, wv, bv, fcos, pcos, fsin, psin):
    """Pure-JAX reference mirroring the PyTorch forward, for validation."""
    B, N, D = x.shape
    mean_x = x.mean(axis=1)                                 # (B, D)
    Q = mean_x @ wq + bq[0]                                 # (B, D)
    K = x @ wk + bk[0]                                      # (B, N, D)
    V = x @ wv + bv[0]                                      # (B, N, D)
    scores = (Q[:, None, :] * K).sum(-1) / jnp.sqrt(jnp.float32(D))
    attn = jax.nn.softmax(scores, axis=-1)[..., None]       # (B, N, 1)
    w = (attn * V).mean(axis=1)                             # (B, D)
    idx = jnp.arange(D, dtype=jnp.float32)
    xm = idx[:, None] - idx[None, :]                        # (D, D)
    cosm = jnp.cos(fcos * xm + pcos)                        # fcos is (D, 1)
    sinm = jnp.sin(fsin * xm + psin)
    return w[:, :, None] * cosm[None], w[:, :, None] * sinm[None]


if __name__ == "__main__":
    B, N, D = 2, 8, 32

    key = jax.random.PRNGKey(0)
    kx, kwq, kwk, kwv, kfc, kfs = jax.random.split(key, 6)

    x = jax.random.normal(kx, (B, N, D), dtype=jnp.float32)

    # nn.Linear(D, D) weights stored as (D_in, D_out); zero biases for determinism.
    wq = jax.random.normal(kwq, (D, D), dtype=jnp.float32) * 0.1
    wk = jax.random.normal(kwk, (D, D), dtype=jnp.float32) * 0.1
    wv = jax.random.normal(kwv, (D, D), dtype=jnp.float32) * 0.1
    bq = jnp.zeros((1, D), dtype=jnp.float32)
    bk = jnp.zeros((1, D), dtype=jnp.float32)
    bv = jnp.zeros((1, D), dtype=jnp.float32)

    # frequency_* ~ randn(D), phase_* = zeros(D) (as in __init__), shaped (D, 1).
    fcos = jax.random.normal(kfc, (D, 1), dtype=jnp.float32)
    fsin = jax.random.normal(kfs, (D, 1), dtype=jnp.float32)
    pcos = jnp.zeros((D, 1), dtype=jnp.float32)
    psin = jnp.zeros((D, 1), dtype=jnp.float32)

    params = (wq, bq, wk, bk, wv, bv, fcos, pcos, fsin, psin)

    cos_out, sin_out = cosine_sine_basis(x, *params)
    jax.block_until_ready((cos_out, sin_out))

    ref_cos, ref_sin = _reference(x, *params)
    assert cos_out.shape == (B, D, D) and sin_out.shape == (B, D, D)
    assert jnp.allclose(cos_out, ref_cos, atol=2e-5, rtol=2e-5)
    assert jnp.allclose(sin_out, ref_sin, atol=2e-5, rtol=2e-5)

    print("KERNEL_OK")
</pallas_src>

<mosaic_0001>
module attributes {stable_mosaic.version = 11 : i64} {
  func.func @_cossin_kernel(%arg0: i32, %arg1: i32, %arg2: memref<2x8x32xf32, #tpu.memory_space<vmem>>, %arg3: memref<32x384xf32, #tpu.memory_space<vmem>>, %arg4: memref<1x384xf32, #tpu.memory_space<vmem>>, %arg5: memref<32x1024xf32, #tpu.memory_space<vmem>>, %arg6: memref<2x1024xf32, #tpu.memory_space<vmem>>, %arg7: memref<2x1024xf32, #tpu.memory_space<vmem>>, %arg8: memref<2x1024xf32, #tpu.memory_space<vmem>>, %arg9: memref<2x32xf32, #tpu.memory_space<vmem>>) attributes {dimension_semantics = [#tpu.dimension_semantics<parallel>, #tpu.dimension_semantics<arbitrary>], iteration_bounds = array<i64: 1, 1>, scalar_prefetch = 0 : i64, scratch_operands = 1 : i64, tpu.core_type = #tpu.core_type<tc>, window_params = [{transform_indices = @transform_0, window_bounds = array<i64: 2, 8, 32>}, {pipeline_mode = #tpu.pipeline_mode<synchronous>, transform_indices = @transform_1, window_bounds = array<i64: 32, 384>}, {pipeline_mode = #tpu.pipeline_mode<synchronous>, transform_indices = @transform_2, window_bounds = array<i64: 1, 384>}, {pipeline_mode = #tpu.pipeline_mode<synchronous>, transform_indices = @transform_3, window_bounds = array<i64: 32, 1024>}, {pipeline_mode = #tpu.pipeline_mode<synchronous>, transform_indices = @transform_4, window_bounds = array<i64: 2, 1024>}, {transform_indices = @transform_5, window_bounds = array<i64: 2, 1024>}, {transform_indices = @transform_6, window_bounds = array<i64: 2, 1024>}]} {
    %c0_i32 = arith.constant 0 : i32
    %0 = arith.cmpi eq, %arg1, %c0_i32 : i32
    %1 = arith.extui %0 : i1 to i32
    %c0_i32_0 = arith.constant 0 : i32
    %2 = arith.cmpi ne, %1, %c0_i32_0 : i32
    scf.if %2 {
      %c0_11 = arith.constant 0 : index
      %c0_12 = arith.constant 0 : index
      %c0_13 = arith.constant 0 : index
      %14 = vector.load %arg2[%c0_11, %c0_12, %c0_13] : memref<2x8x32xf32, #tpu.memory_space<vmem>>, vector<2x8x32xf32>
      %15 = vector.shape_cast %14 : vector<2x8x32xf32> to vector<16x32xf32>
      %c0_14 = arith.constant 0 : index
      %c0_15 = arith.constant 0 : index
      %16 = vector.load %arg3[%c0_14, %c0_15] : memref<32x384xf32, #tpu.memory_space<vmem>>, vector<32x384xf32>
      %cst_16 = arith.constant dense<0.000000e+00> : vector<16x384xf32>
      %17 = tpu.matmul %15, %16, %cst_16 {dimension_numbers = #tpu.dot_dimension_numbers<[1], [0], [0], [1], [0, 0, 1, 1], [], []>} : vector<16x32xf32>, vector<32x384xf32>, vector<16x384xf32> -> vector<16x384xf32>
      %c0_17 = arith.constant 0 : index
      %c0_18 = arith.constant 0 : index
      %18 = vector.load %arg4[%c0_17, %c0_18] : memref<1x384xf32, #tpu.memory_space<vmem>>, vector<1x384xf32>
      %19 = vector.broadcast %18 : vector<1x384xf32> to vector<16x384xf32>
      %20 = arith.addf %17, %19 : vector<16x384xf32>
      %21 = vector.shape_cast %20 : vector<16x384xf32> to vector<2x8x384xf32>
      %22 = vector.extract_strided_slice %21 {offsets = [0, 0, 0], sizes = [2, 8, 32], strides = [1, 1, 1]} : vector<2x8x384xf32> to vector<2x8x32xf32>
      %cst_19 = arith.constant dense<0.000000e+00> : vector<2x32xf32>
      %23 = vector.multi_reduction <add>, %22, %cst_19 [1] : vector<2x8x32xf32> to vector<2x32xf32>
      %cst_20 = arith.constant 8.000000e+00 : f32
      %24 = vector.broadcast %cst_20 : f32 to vector<2x32xf32>
      %25 = arith.divf %23, %24 : vector<2x32xf32>
      %26 = vector.extract_strided_slice %21 {offsets = [0, 0, 128], sizes = [2, 8, 32], strides = [1, 1, 1]} : vector<2x8x384xf32> to vector<2x8x32xf32>
      %27 = vector.extract_strided_slice %21 {offsets = [0, 0, 256], sizes = [2, 8, 32], strides = [1, 1, 1]} : vector<2x8x384xf32> to vector<2x8x32xf32>
      %28 = vector.shape_cast %25 : vector<2x32xf32> to vector<2x1x32xf32>
      %29 = vector.broadcast %28 : vector<2x1x32xf32> to vector<2x8x32xf32>
      %30 = arith.mulf %26, %29 : vector<2x8x32xf32>
      %cst_21 = arith.constant dense<0.000000e+00> : vector<2x8xf32>
      %31 = vector.multi_reduction <add>, %30, %cst_21 [2] : vector<2x8x32xf32> to vector<2x8xf32>
      %32 = vector.shape_cast %31 : vector<2x8xf32> to vector<2x8x1xf32>
      %cst_22 = arith.constant 0.176776692 : f32
      %33 = vector.broadcast %cst_22 : f32 to vector<2x8x1xf32>
      %34 = arith.mulf %32, %33 : vector<2x8x1xf32>
      %cst_23 = arith.constant dense<0xFF800000> : vector<2x1xf32>
      %35 = vector.multi_reduction <maximumf>, %34, %cst_23 [1] : vector<2x8x1xf32> to vector<2x1xf32>
      %36 = vector.shape_cast %35 : vector<2x1xf32> to vector<2x1x1xf32>
      %37 = vector.broadcast %36 : vector<2x1x1xf32> to vector<2x8x1xf32>
      %38 = arith.subf %34, %37 : vector<2x8x1xf32>
      %39 = math.exp %38 : vector<2x8x1xf32>
      %cst_24 = arith.constant dense<0.000000e+00> : vector<2x1xf32>
      %40 = vector.multi_reduction <add>, %39, %cst_24 [1] : vector<2x8x1xf32> to vector<2x1xf32>
      %41 = vector.shape_cast %40 : vector<2x1xf32> to vector<2x1x1xf32>
      %42 = vector.broadcast %41 : vector<2x1x1xf32> to vector<2x8x1xf32>
      %43 = arith.divf %39, %42 : vector<2x8x1xf32>
      %44 = vector.broadcast %43 : vector<2x8x1xf32> to vector<2x8x32xf32>
      %45 = arith.mulf %44, %27 : vector<2x8x32xf32>
      %cst_25 = arith.constant dense<0.000000e+00> : vector<2x32xf32>
      %46 = vector.multi_reduction <add>, %45, %cst_25 [1] : vector<2x8x32xf32> to vector<2x32xf32>
      %cst_26 = arith.constant 8.000000e+00 : f32
      %47 = vector.broadcast %cst_26 : f32 to vector<2x32xf32>
      %48 = arith.divf %46, %47 : vector<2x32xf32>
      %c0_27 = arith.constant 0 : index
      %c0_28 = arith.constant 0 : index
      %49 = vector.load %arg9[%c0_27, %c0_28] : memref<2x32xf32, #tpu.memory_space<vmem>>, vector<2x32xf32>
      tpu.vector_store %arg9[%c0_27, %c0_28], %48 {strides = array<i32>} : memref<2x32xf32, #tpu.memory_space<vmem>>, vector<2x32xf32>,
    } else {
    }
    %c0 = arith.constant 0 : index
    %c0_1 = arith.constant 0 : index
    %3 = vector.load %arg9[%c0, %c0_1] : memref<2x32xf32, #tpu.memory_space<vmem>>, vector<2x32xf32>
    %c0_2 = arith.constant 0 : index
    %c0_3 = arith.constant 0 : index
    %4 = vector.load %arg5[%c0_2, %c0_3] : memref<32x1024xf32, #tpu.memory_space<vmem>>, vector<32x1024xf32>
    %cst = arith.constant dense<0.000000e+00> : vector<2x1024xf32>
    %5 = tpu.matmul %3, %4, %cst {dimension_numbers = #tpu.dot_dimension_numbers<[1], [0], [0], [1], [0, 0, 1, 1], [], []>} : vector<2x32xf32>, vector<32x1024xf32>, vector<2x1024xf32> -> vector<2x1024xf32>
    %c0_4 = arith.constant 0 : index
    %c0_5 = arith.constant 0 : index
    %6 = vector.load %arg6[%c0_4, %c0_5] : memref<2x1024xf32, #tpu.memory_space<vmem>>, vector<1x1024xf32>
    %7 = vector.broadcast %6 : vector<1x1024xf32> to vector<2x1024xf32>
    %8 = arith.mulf %5, %7 : vector<2x1024xf32>
    %c0_6 = arith.constant 0 : index
    %c0_7 = arith.constant 0 : index
    %9 = vector.load %arg7[%c0_6, %c0_7] : memref<2x1024xf32, #tpu.memory_space<vmem>>, vector<2x1024xf32>
    tpu.vector_store %arg7[%c0_6, %c0_7], %8 {strides = array<i32>} : memref<2x1024xf32, #tpu.memory_space<vmem>>, vector<2x1024xf32>,
    %c1 = arith.constant 1 : index
    %c0_8 = arith.constant 0 : index
    %10 = vector.load %arg6[%c1, %c0_8] : memref<2x1024xf32, #tpu.memory_space<vmem>>, vector<1x1024xf32>
    %11 = vector.broadcast %10 : vector<1x1024xf32> to vector<2x1024xf32>
    %12 = arith.mulf %5, %11 : vector<2x1024xf32>
    %c0_9 = arith.constant 0 : index
    %c0_10 = arith.constant 0 : index
    %13 = vector.load %arg8[%c0_9, %c0_10] : memref<2x1024xf32, #tpu.memory_space<vmem>>, vector<2x1024xf32>
    tpu.vector_store %arg8[%c0_9, %c0_10], %12 {strides = array<i32>} : memref<2x1024xf32, #tpu.memory_space<vmem>>, vector<2x1024xf32>,
    return
  }
  func.func @transform_0(%arg0: i32, %arg1: i32) -> (i32, i32, i32) {
    %c0_i32 = arith.constant 0 : i32
    %c0_i32_0 = arith.constant 0 : i32
    %c0_i32_1 = arith.constant 0 : i32
    return %arg0, %c0_i32, %c0_i32_0 : i32, i32, i32
  }
  func.func @transform_1(%arg0: i32, %arg1: i32) -> (i32, i32) {
    %c0_i32 = arith.constant 0 : i32
    %c0_i32_0 = arith.constant 0 : i32
    %c0_i32_1 = arith.constant 0 : i32
    return %c0_i32, %c0_i32_0 : i32, i32
  }
  func.func @transform_2(%arg0: i32, %arg1: i32) -> (i32, i32) {
    %c0_i32 = arith.constant 0 : i32
    %c0_i32_0 = arith.constant 0 : i32
    %c0_i32_1 = arith.constant 0 : i32
    return %c0_i32, %c0_i32_0 : i32, i32
  }
  func.func @transform_3(%arg0: i32, %arg1: i32) -> (i32, i32) {
    %c0_i32 = arith.constant 0 : i32
    %c0_i32_0 = arith.constant 0 : i32
    return %c0_i32, %arg1 : i32, i32
  }
  func.func @transform_4(%arg0: i32, %arg1: i32) -> (i32, i32) {
    %c0_i32 = arith.constant 0 : i32
    %c0_i32_0 = arith.constant 0 : i32
    return %c0_i32, %arg1 : i32, i32
  }
  func.func @transform_5(%arg0: i32, %arg1: i32) -> (i32, i32) {
    %c0_i32 = arith.constant 0 : i32
    return %arg0, %arg1 : i32, i32
  }
  func.func @transform_6(%arg0: i32, %arg1: i32) -> (i32, i32) {
    %c0_i32 = arith.constant 0 : i32
    return %arg0, %arg1 : i32, i32
  }
}

module attributes {stable_mosaic.version = 11 : i64} {
  func.func @_cossin_kernel(%arg0: i32, %arg1: i32, %arg2: memref<2x8x32xf32, #tpu.memory_space<vmem>>, %arg3: memref<32x384xf32, #tpu.memory_space<vmem>>, %arg4: memref<1x384xf32, #tpu.memory_space<vmem>>, %arg5: memref<32x1024xf32, #tpu.memory_space<vmem>>, %arg6: memref<2x1024xf32, #tpu.memory_space<vmem>>, %arg7: memref<2x1024xf32, #tpu.memory_space<vmem>>, %arg8: memref<2x1024xf32, #tpu.memory_space<vmem>>, %arg9: memref<2x32xf32, #tpu.memory_space<vmem>>) attributes {dimension_semantics = [#tpu.dimension_semantics<parallel>, #tpu.dimension_semantics<arbitrary>], iteration_bounds = array<i64: 1, 1>, scalar_prefetch = 0 : i64, scratch_operands = 1 : i64, tpu.core_type = #tpu.core_type<tc>, window_params = [{transform_indices = @transform_0, window_bounds = array<i64: 2, 8, 32>}, {pipeline_mode = #tpu.pipeline_mode<synchronous>, transform_indices = @transform_1, window_bounds = array<i64: 32, 384>}, {pipeline_mode = #tpu.pipeline_mode<synchronous>, transform_indices = @transform_2, window_bounds = array<i64: 1, 384>}, {transform_indices = @transform_3, window_bounds = array<i64: 32, 1024>}, {transform_indices = @transform_4, window_bounds = array<i64: 2, 1024>}, {transform_indices = @transform_5, window_bounds = array<i64: 2, 1024>}, {transform_indices = @transform_6, window_bounds = array<i64: 2, 1024>}]} {
    %c0_i32 = arith.constant 0 : i32
    %0 = arith.cmpi eq, %arg1, %c0_i32 : i32
    %1 = arith.extui %0 : i1 to i32
    %c0_i32_0 = arith.constant 0 : i32
    %2 = arith.cmpi ne, %1, %c0_i32_0 : i32
    scf.if %2 {
      %c0_11 = arith.constant 0 : index
      %c0_12 = arith.constant 0 : index
      %c0_13 = arith.constant 0 : index
      %14 = vector.load %arg2[%c0_11, %c0_12, %c0_13] : memref<2x8x32xf32, #tpu.memory_space<vmem>>, vector<2x8x32xf32>
      %15 = vector.shape_cast %14 : vector<2x8x32xf32> to vector<16x32xf32>
      %c0_14 = arith.constant 0 : index
      %c0_15 = arith.constant 0 : index
      %16 = vector.load %arg3[%c0_14, %c0_15] : memref<32x384xf32, #tpu.memory_space<vmem>>, vector<32x384xf32>
      %cst_16 = arith.constant dense<0.000000e+00> : vector<16x384xf32>
      %17 = tpu.matmul %15, %16, %cst_16 {dimension_numbers = #tpu.dot_dimension_numbers<[1], [0], [0], [1], [0, 0, 1, 1], [], []>} : vector<16x32xf32>, vector<32x384xf32>, vector<16x384xf32> -> vector<16x384xf32>
      %c0_17 = arith.constant 0 : index
      %c0_18 = arith.constant 0 : index
      %18 = vector.load %arg4[%c0_17, %c0_18] : memref<1x384xf32, #tpu.memory_space<vmem>>, vector<1x384xf32>
      %19 = vector.broadcast %18 : vector<1x384xf32> to vector<16x384xf32>
      %20 = arith.addf %17, %19 : vector<16x384xf32>
      %21 = vector.shape_cast %20 : vector<16x384xf32> to vector<2x8x384xf32>
      %22 = vector.extract_strided_slice %21 {offsets = [0, 0, 0], sizes = [2, 8, 32], strides = [1, 1, 1]} : vector<2x8x384xf32> to vector<2x8x32xf32>
      %cst_19 = arith.constant dense<0.000000e+00> : vector<2x32xf32>
      %23 = vector.multi_reduction <add>, %22, %cst_19 [1] : vector<2x8x32xf32> to vector<2x32xf32>
      %cst_20 = arith.constant 8.000000e+00 : f32
      %24 = vector.broadcast %cst_20 : f32 to vector<2x32xf32>
      %25 = arith.divf %23, %24 : vector<2x32xf32>
      %26 = vector.extract_strided_slice %21 {offsets = [0, 0, 128], sizes = [2, 8, 32], strides = [1, 1, 1]} : vector<2x8x384xf32> to vector<2x8x32xf32>
      %27 = vector.extract_strided_slice %21 {offsets = [0, 0, 256], sizes = [2, 8, 32], strides = [1, 1, 1]} : vector<2x8x384xf32> to vector<2x8x32xf32>
      %28 = vector.shape_cast %25 : vector<2x32xf32> to vector<2x1x32xf32>
      %29 = vector.broadcast %28 : vector<2x1x32xf32> to vector<2x8x32xf32>
      %30 = arith.mulf %26, %29 : vector<2x8x32xf32>
      %cst_21 = arith.constant dense<0.000000e+00> : vector<2x8xf32>
      %31 = vector.multi_reduction <add>, %30, %cst_21 [2] : vector<2x8x32xf32> to vector<2x8xf32>
      %32 = vector.shape_cast %31 : vector<2x8xf32> to vector<2x8x1xf32>
      %cst_22 = arith.constant 0.176776692 : f32
      %33 = vector.broadcast %cst_22 : f32 to vector<2x8x1xf32>
      %34 = arith.mulf %32, %33 : vector<2x8x1xf32>
      %cst_23 = arith.constant dense<0xFF800000> : vector<2x1xf32>
      %35 = vector.multi_reduction <maximumf>, %34, %cst_23 [1] : vector<2x8x1xf32> to vector<2x1xf32>
      %36 = vector.shape_cast %35 : vector<2x1xf32> to vector<2x1x1xf32>
      %37 = vector.broadcast %36 : vector<2x1x1xf32> to vector<2x8x1xf32>
      %38 = arith.subf %34, %37 : vector<2x8x1xf32>
      %39 = math.exp %38 : vector<2x8x1xf32>
      %cst_24 = arith.constant dense<0.000000e+00> : vector<2x1xf32>
      %40 = vector.multi_reduction <add>, %39, %cst_24 [1] : vector<2x8x1xf32> to vector<2x1xf32>
      %41 = vector.shape_cast %40 : vector<2x1xf32> to vector<2x1x1xf32>
      %42 = vector.broadcast %41 : vector<2x1x1xf32> to vector<2x8x1xf32>
      %43 = arith.divf %39, %42 : vector<2x8x1xf32>
      %44 = vector.broadcast %43 : vector<2x8x1xf32> to vector<2x8x32xf32>
      %45 = arith.mulf %44, %27 : vector<2x8x32xf32>
      %cst_25 = arith.constant dense<0.000000e+00> : vector<2x32xf32>
      %46 = vector.multi_reduction <add>, %45, %cst_25 [1] : vector<2x8x32xf32> to vector<2x32xf32>
      %cst_26 = arith.constant 8.000000e+00 : f32
      %47 = vector.broadcast %cst_26 : f32 to vector<2x32xf32>
      %48 = arith.divf %46, %47 : vector<2x32xf32>
      %c0_27 = arith.constant 0 : index
      %c0_28 = arith.constant 0 : index
      %49 = vector.load %arg9[%c0_27, %c0_28] : memref<2x32xf32, #tpu.memory_space<vmem>>, vector<2x32xf32>
      tpu.vector_store %arg9[%c0_27, %c0_28], %48 {strides = array<i32>} : memref<2x32xf32, #tpu.memory_space<vmem>>, vector<2x32xf32>,
    } else {
    }
    %c0 = arith.constant 0 : index
    %c0_1 = arith.constant 0 : index
    %3 = vector.load %arg9[%c0, %c0_1] : memref<2x32xf32, #tpu.memory_space<vmem>>, vector<2x32xf32>
    %c0_2 = arith.constant 0 : index
    %c0_3 = arith.constant 0 : index
    %4 = vector.load %arg5[%c0_2, %c0_3] : memref<32x1024xf32, #tpu.memory_space<vmem>>, vector<32x1024xf32>
    %cst = arith.constant dense<0.000000e+00> : vector<2x1024xf32>
    %5 = tpu.matmul %3, %4, %cst {dimension_numbers = #tpu.dot_dimension_numbers<[1], [0], [0], [1], [0, 0, 1, 1], [], []>} : vector<2x32xf32>, vector<32x1024xf32>, vector<2x1024xf32> -> vector<2x1024xf32>
    %c0_4 = arith.constant 0 : index
    %c0_5 = arith.constant 0 : index
    %6 = vector.load %arg6[%c0_4, %c0_5] : memref<2x1024xf32, #tpu.memory_space<vmem>>, vector<1x1024xf32>
    %7 = vector.broadcast %6 : vector<1x1024xf32> to vector<2x1024xf32>
    %8 = arith.mulf %5, %7 : vector<2x1024xf32>
    %c0_6 = arith.constant 0 : index
    %c0_7 = arith.constant 0 : index
    %9 = vector.load %arg7[%c0_6, %c0_7] : memref<2x1024xf32, #tpu.memory_space<vmem>>, vector<2x1024xf32>
    tpu.vector_store %arg7[%c0_6, %c0_7], %8 {strides = array<i32>} : memref<2x1024xf32, #tpu.memory_space<vmem>>, vector<2x1024xf32>,
    %c1 = arith.constant 1 : index
    %c0_8 = arith.constant 0 : index
    %10 = vector.load %arg6[%c1, %c0_8] : memref<2x1024xf32, #tpu.memory_space<vmem>>, vector<1x1024xf32>
    %11 = vector.broadcast %10 : vector<1x1024xf32> to vector<2x1024xf32>
    %12 = arith.mulf %5, %11 : vector<2x1024xf32>
    %c0_9 = arith.constant 0 : index
    %c0_10 = arith.constant 0 : index
    %13 = vector.load %arg8[%c0_9, %c0_10] : memref<2x1024xf32, #tpu.memory_space<vmem>>, vector<2x1024xf32>
    tpu.vector_store %arg8[%c0_9, %c0_10], %12 {strides = array<i32>} : memref<2x1024xf32, #tpu.memory_space<vmem>>, vector<2x1024xf32>,
    return
  }
  func.func @transform_0(%arg0: i32, %arg1: i32) -> (i32, i32, i32) {
    %c0_i32 = arith.constant 0 : i32
    %c0_i32_0 = arith.constant 0 : i32
    %c0_i32_1 = arith.constant 0 : i32
    return %arg0, %c0_i32, %c0_i32_0 : i32, i32, i32
  }
  func.func @transform_1(%arg0: i32, %arg1: i32) -> (i32, i32) {
    %c0_i32 = arith.constant 0 : i32
    %c0_i32_0 = arith.constant 0 : i32
    %c0_i32_1 = arith.constant 0 : i32
    return %c0_i32, %c0_i32_0 : i32, i32
  }
  func.func @transform_2(%arg0: i32, %arg1: i32) -> (i32, i32) {
    %c0_i32 = arith.constant 0 : i32
    %c0_i32_0 = arith.constant 0 : i32
    %c0_i32_1 = arith.constant 0 : i32
    return %c0_i32, %c0_i32_0 : i32, i32
  }
  func.func @transform_3(%arg0: i32, %arg1: i32) -> (i32, i32) {
    %c0_i32 = arith.constant 0 : i32
    %c0_i32_0 = arith.constant 0 : i32
    return %c0_i32, %arg1 : i32, i32
  }
  func.func @transform_4(%arg0: i32, %arg1: i32) -> (i32, i32) {
    %c0_i32 = arith.constant 0 : i32
    %c0_i32_0 = arith.constant 0 : i32
    return %c0_i32, %arg1 : i32, i32
  }
  func.func @transform_5(%arg0: i32, %arg1: i32) -> (i32, i32) {
    %c0_i32 = arith.constant 0 : i32
    return %arg0, %arg1 : i32, i32
  }
  func.func @transform_6(%arg0: i32, %arg1: i32) -> (i32, i32) {
    %c0_i32 = arith.constant 0 : i32
    return %arg0, %arg1 : i32, i32
  }
}

</mosaic_0001>

<llo_original>
// kernel: _cosine_sine_basis_impl.1
$region0: #{_cosine_sine_basis_impl.1}
  #allocation0 [shape = 'u32[]', space=smem, size = 0x4, offset = 0x4, fixed_abs, tag = 'smem constant byte address 0x4 - core index']
  #allocation1 [shape = 'u32[72,128]{1,0:T(1,128)}', space=vmem, size = 0x9000, scoped, tag = 'internal scratch']
  #allocation2 [shape = 'f32[2,32]{1,0:T(2,128)}', space=vmem, size = 0x400, scoped, tag = 'scratch operand']
  %s0 = inlined_call_operand.vmem [shape: f32[2,8,32], index: 0, kind: input, shape index: {}]
  %s1 = inlined_call_operand.vmem [shape: f32[32,384], index: 1, kind: input, shape index: {}]
  %s2 = inlined_call_operand.vmem [shape: f32[1,384], index: 2, kind: input, shape index: {}]
  %s3 = inlined_call_operand.vmem [shape: f32[32,1024], index: 3, kind: input, shape index: {}]
  %s4 = inlined_call_operand.vmem [shape: f32[2,1024], index: 4, kind: input, shape index: {}]
  %s5 = inlined_call_operand.vmem [shape: f32[2,1024], index: 5, kind: output, shape index: {0}]
  %s6 = inlined_call_operand.vmem [shape: f32[2,1024], index: 6, kind: output, shape index: {1}]
  %7 = xla_tuple %s5, %s6
  %s8 = sld [smem:[#allocation0]]
  $region42: #{_cosine_sine_basis_impl.1} parent=0
    _
  %s10 = ssub.s32 1, %s8
  %s11 = scalar_select 0, %s10, %s8
  // Predicated region
  $region2: #{_cosine_sine_basis_impl.1} parent=0 // pred_check
    _
  $region3: #{_cosine_sine_basis_impl.1} parent=0 // pred_check_branch
    %13 = sbr.rel (0) target = $region5
  $region4: #{_cosine_sine_basis_impl.1} parent=0 // pred_region
    _
  $region5: #{_cosine_sine_basis_impl.1} parent=0 // pred_fallthru
    _
  // Predicated region
  $region6: #{_cosine_sine_basis_impl.1} parent=0 // pred_check
    _
  $region7: #{_cosine_sine_basis_impl.1} parent=0 // pred_check_branch
    %15 = sbr.rel (0) target = $region9
  $region8: #{_cosine_sine_basis_impl.1} parent=0 // pred_region
    _
  $region9: #{_cosine_sine_basis_impl.1} parent=0 // pred_fallthru
    _
  // Predicated region
  $region10: #{_cosine_sine_basis_impl.1} parent=0 // pred_check
    _
  $region11: #{_cosine_sine_basis_impl.1} parent=0 // pred_check_branch
    %17 = sbr.rel (0) target = $region13
  $region12: #{_cosine_sine_basis_impl.1} parent=0 // pred_region
    _
  $region13: #{_cosine_sine_basis_impl.1} parent=0 // pred_fallthru
    _
  // Predicated region
  $region14: #{_cosine_sine_basis_impl.1} parent=0 // pred_check
    _
  $region15: #{_cosine_sine_basis_impl.1} parent=0 // pred_check_branch
    %19 = sbr.rel (0) target = $region17
  $region16: #{_cosine_sine_basis_impl.1} parent=0 // pred_region
    _
  $region17: #{_cosine_sine_basis_impl.1} parent=0 // pred_fallthru
    _
  // Predicated region
  $region18: #{_cosine_sine_basis_impl.1} parent=0 // pred_check
    _
  $region19: #{_cosine_sine_basis_impl.1} parent=0 // pred_check_branch
    %21 = sbr.rel (0) target = $region21
  $region20: #{_cosine_sine_basis_impl.1} parent=0 // pred_region
    _
  $region21: #{_cosine_sine_basis_impl.1} parent=0 // pred_fallthru
    _
  %p22 = scmp.eq.s32.totalorder 0, 0
  // Predicated region
  $region22: #{_cosine_sine_basis_impl.1} parent=0 // pred_check
    %p23 = pneg %p22
  $region23: #{_cosine_sine_basis_impl.1} parent=0 // pred_check_branch
    %25 = sbr.rel (%p23) target = $region25
  $region24: #{_cosine_sine_basis_impl.1} parent=0 // pred_region
    %v26 = vld [vmem:[%s0] sm:$0xff]
    %v27 = vld [vmem:[%s0 + $0x8] sm:$0xff]
    %v28 = vld [vmem:[%s1] sm:$0xff]
    %v29 = vld [vmem:[%s1 + $0x8] sm:$0xff]
    %v30 = vld [vmem:[%s1 + $0x10] sm:$0xff]
    %v31 = vld [vmem:[%s1 + $0x18] sm:$0xff]
    %v32 = vld [vmem:[%s1 + $0x20] sm:$0xff]
    %v33 = vld [vmem:[%s1 + $0x28] sm:$0xff]
    %v34 = vld [vmem:[%s1 + $0x30] sm:$0xff]
    %v35 = vld [vmem:[%s1 + $0x38] sm:$0xff]
    %v36 = vld [vmem:[%s1 + $0x40] sm:$0xff]
    %v37 = vld [vmem:[%s1 + $0x48] sm:$0xff]
    %v38 = vld [vmem:[%s1 + $0x50] sm:$0xff]
    %v39 = vld [vmem:[%s1 + $0x58] sm:$0xff]
    %v40 = vld [vmem:[%s2] sm:$0x7]
    %v42 = vperm.slane %v40, 0
    %v43 = vperm.slane %v40, 1
    %v44 = vperm.slane %v40, 2
    %vm48 = vcmask 261120
    %v50 = vsel %vm48, %v26, 0
    %v53 = vsel %vm48, %v27, 0
    %55 = vmatpush.msra.mxu0 0.0
    %56 = vmatpush.msra.mxu0 0.0
    %57 = vmatpush.msra.mxu0 0.0
    %58 = vmatpush.msra.mxu0 0.0
    %59 = vmatpush.msra.mxu0 0.0
    %60 = vmatpush.msra.mxu0 0.0
    %61 = vmatpush.msra.mxu0 0.0
    %62 = vmatpush.msra.mxu0 0.0
    %63 = vmatpush.msra.mxu0 0.0
    %64 = vmatpush.msra.mxu0 0.0
    %65 = vmatpush.msra.mxu0 0.0
    %66 = vmatpush.msra.mxu0 0.0
    %67 = vmatpush.msra.mxu0 %v37
    %68 = vmatpush.msra.mxu0 %v34
    %69 = vmatpush.msra.mxu0 %v31
    %70 = vmatpush.msra.mxu0 %v28
    %71 = vmatmul.f32.gmra.mxu0 %v50
    %v72 = vpop.f32.mrf.mxu0
    %v73 = vadd.f32 %v42, %v72
    %74 = vmatmul.f32.gmra.mxu0 %v53
    %v75 = vpop.f32.mrf.mxu0
    %v76 = vadd.f32 %v42, %v75
    %77 = vdwg.mxu0
    %78 = vmatpush.msra.mxu0 0.0
    %79 = vmatpush.msra.mxu0 0.0
    %80 = vmatpush.msra.mxu0 0.0
    %81 = vmatpush.msra.mxu0 0.0
    %82 = vmatpush.msra.mxu0 0.0
    %83 = vmatpush.msra.mxu0 0.0
    %84 = vmatpush.msra.mxu0 0.0
    %85 = vmatpush.msra.mxu0 0.0
    %86 = vmatpush.msra.mxu0 0.0
    %87 = vmatpush.msra.mxu0 0.0
    %88 = vmatpush.msra.mxu0 0.0
    %89 = vmatpush.msra.mxu0 0.0
    %90 = vmatpush.msra.mxu0 %v38
    %91 = vmatpush.msra.mxu0 %v35
    %92 = vmatpush.msra.mxu0 %v32
    %93 = vmatpush.msra.mxu0 %v29
    %94 = vmatmul.f32.gmra.mxu0 %v50
    %v95 = vpop.f32.mrf.mxu0
    %v96 = vadd.f32 %v43, %v95
    %97 = vmatmul.f32.gmra.mxu0 %v53
    %v98 = vpop.f32.mrf.mxu0
    %v99 = vadd.f32 %v43, %v98
    %100 = vdwg.mxu0
    %101 = vmatpush.msra.mxu0 0.0
    %102 = vmatpush.msra.mxu0 0.0
    %103 = vmatpush.msra.mxu0 0.0
    %104 = vmatpush.msra.mxu0 0.0
    %105 = vmatpush.msra.mxu0 0.0
    %106 = vmatpush.msra.mxu0 0.0
    %107 = vmatpush.msra.mxu0 0.0
    %108 = vmatpush.msra.mxu0 0.0
    %109 = vmatpush.msra.mxu0 0.0
    %110 = vmatpush.msra.mxu0 0.0
    %111 = vmatpush.msra.mxu0 0.0
    %112 = vmatpush.msra.mxu0 0.0
    %113 = vmatpush.msra.mxu0 %v39
    %114 = vmatpush.msra.mxu0 %v36
    %115 = vmatpush.msra.mxu0 %v33
    %116 = vmatpush.msra.mxu0 %v30
    %117 = vmatmul.f32.gmra.mxu0 %v50
    %v118 = vpop.f32.mrf.mxu0
    %v119 = vadd.f32 %v44, %v118
    %120 = vmatmul.f32.gmra.mxu0 %v53
    %v121 = vpop.f32.mrf.mxu0
    %v122 = vadd.f32 %v44, %v121
    %123 = vdwg.mxu0
    %v124 = vsel %vm48, %v73, 0.0
    %v125 = vrot.slane %v124, 4
    %v126 = vadd.f32 %v124, %v125
    %v127 = vrot.slane %v126, 2
    %v128 = vadd.f32 %v126, %v127
    %v129 = vrot.slane %v128, 1
    %v130 = vadd.f32 %v128, %v129
    %v131 = vsel %vm48, %v76, 0.0
    %v132 = vrot.slane %v131, 4
    %v133 = vadd.f32 %v131, %v132
    %v134 = vrot.slane %v133, 2
    %v135 = vadd.f32 %v133, %v134
    %v136 = vrot.slane %v135, 1
    %v137 = vadd.f32 %v135, %v136
    %v138 = vrcp.pop 8.0
    %v139 = vmul.f32 8.0, %v138
    %v140 = vsub.f32 1.0, %v139
    %v141 = vmul.f32 %v138, %v140
    %v142 = vadd.f32 %v138, %v141
    %vm143 = vweird.f32 %v138
    %v144 = vsel %vm143, %v138, %v142
    %v145 = vmul.f32 %v130, %v144
    %v146 = vmul.f32 %v137, %v144
    %v147 = vmul.f32 %v96, %v145
    %v148 = vmul.f32 %v99, %v146
    %v149 = vsel %vm48, %v147, 0.0
    %150 = vadd.xlane.f32.xlu0 %v149
    %v151 = vpop.xlane.xlu0 %150
    %v152 = vsel %vm48, %v148, 0.0
    %153 = vadd.xlane.f32.xlu0 %v152
    %v154 = vpop.xlane.xlu0 %153
    %v155 = vmul.f32 %v151, 0.17677669
    %v156 = vmul.f32 %v154, 0.17677669
    %v157 = vrot.slane %v155, 4
    %v158 = vmax.f32 %v155, %v157
    %v159 = vrot.slane %v158, 2
    %v160 = vmax.f32 %v158, %v159
    %v161 = vrot.slane %v160, 1
    %v162 = vmax.f32 %v160, %v161
    %v163 = vrot.slane %v156, 4
    %v164 = vmax.f32 %v156, %v163
    %v165 = vrot.slane %v164, 2
    %v166 = vmax.f32 %v164, %v165
    %v167 = vrot.slane %v166, 1
    %v168 = vmax.f32 %v166, %v167
    %v169 = vsub.f32 %v155, %v162
    %v170 = vsub.f32 %v156, %v168
    %v171 = vmul.f32 %v169, 1.442695
    %v172 = vpow.pop %v171
    %v173 = vmul.f32 %v170, 1.442695
    %v174 = vpow.pop %v173
    %v175 = vrot.slane %v172, 4
    %v176 = vadd.f32 %v172, %v175
    %v177 = vrot.slane %v176, 2
    %v178 = vadd.f32 %v176, %v177
    %v179 = vrot.slane %v178, 1
    %v180 = vadd.f32 %v178, %v179
    %v181 = vrot.slane %v174, 4
    %v182 = vadd.f32 %v174, %v181
    %v183 = vrot.slane %v182, 2
    %v184 = vadd.f32 %v182, %v183
    %v185 = vrot.slane %v184, 1
    %v186 = vadd.f32 %v184, %v185
    %v187 = vrcp.pop %v180
    %v188 = vmul.f32 %v180, %v187
    %v189 = vsub.f32 1.0, %v188
    %v190 = vmul.f32 %v187, %v189
    %v191 = vadd.f32 %v187, %v190
    %vm192 = vweird.f32 %v180
    %vm193 = vweird.f32 %v187
    %vm194 = vmor %vm192, %vm193
    %v195 = vsel %vm194, %v187, %v191
    %v196 = vand.u32 2147483647, %v180
    %vm197 = vcmp.eq.f32.partialorder %v196, 8.507059e+37
    %v198 = vand.u32 %v180, 2147483648
    %v199 = vor.u32 1.1754944e-38, %v198
    %v200 = vsel %vm197, %v199, %v195
    %v201 = vmul.f32 %v172, %v200
    %v202 = vrcp.pop %v186
    %v203 = vmul.f32 %v186, %v202
    %v204 = vsub.f32 1.0, %v203
    %v205 = vmul.f32 %v202, %v204
    %v206 = vadd.f32 %v202, %v205
    %vm207 = vweird.f32 %v186
    %vm208 = vweird.f32 %v202
    %vm209 = vmor %vm207, %vm208
    %v210 = vsel %vm209, %v202, %v206
    %v211 = vand.u32 2147483647, %v186
    %vm212 = vcmp.eq.f32.partialorder %v211, 8.507059e+37
    %v213 = vand.u32 %v186, 2147483648
    %v214 = vor.u32 1.1754944e-38, %v213
    %v215 = vsel %vm212, %v214, %v210
    %v216 = vmul.f32 %v174, %v215
    %v217 = vmul.f32 %v201, %v119
    %v218 = vmul.f32 %v216, %v122
    %v219 = vsel %vm48, %v217, 0.0
    %v220 = vrot.slane %v219, 4
    %v221 = vadd.f32 %v219, %v220
    %v222 = vrot.slane %v221, 2
    %v223 = vadd.f32 %v221, %v222
    %v224 = vrot.slane %v223, 1
    %v225 = vadd.f32 %v223, %v224
    %v226 = vsel %vm48, %v218, 0.0
    %v227 = vrot.slane %v226, 4
    %v228 = vadd.f32 %v226, %v227
    %v229 = vrot.slane %v228, 2
    %v230 = vadd.f32 %v228, %v229
    %v231 = vrot.slane %v230, 1
    %v232 = vadd.f32 %v230, %v231
    %v233 = vmul.f32 %v225, %v144
    %v234 = vmul.f32 %v232, %v144
    %vm237 = vcmask 1041409
    %v238 = vsel %vm237, %v234, %v233
    %vm240 = vcmask 254976
    %241 = vst.msk [vmem:[#allocation2] sm:$0x3] %vm240, %v238
  $region25: #{_cosine_sine_basis_impl.1} parent=0 // pred_fallthru
    _
  %v242 = vld [vmem:[#allocation2] sm:$0x3]
  %v243 = vld [vmem:[%s3] sm:$0xff]
  %v244 = vld [vmem:[%s3 + $0x8] sm:$0xff]
  %v245 = vld [vmem:[%s3 + $0x10] sm:$0xff]
  %v246 = vld [vmem:[%s3 + $0x18] sm:$0xff]
  %v247 = vld [vmem:[%s3 + $0x20] sm:$0xff]
  %v248 = vld [vmem:[%s3 + $0x28] sm:$0xff]
  %v249 = vld [vmem:[%s3 + $0x30] sm:$0xff]
  %v250 = vld [vmem:[%s3 + $0x38] sm:$0xff]
  %v251 = vld [vmem:[%s3 + $0x40] sm:$0xff]
  %v252 = vld [vmem:[%s3 + $0x48] sm:$0xff]
  %v253 = vld [vmem:[%s3 + $0x50] sm:$0xff]
  %v254 = vld [vmem:[%s3 + $0x58] sm:$0xff]
  %v255 = vld [vmem:[%s3 + $0x60] sm:$0xff]
  %v256 = vld [vmem:[%s3 + $0x68] sm:$0xff]
  %v257 = vld [vmem:[%s3 + $0x70] sm:$0xff]
  %v258 = vld [vmem:[%s3 + $0x78] sm:$0xff]
  %v259 = vld [vmem:[%s3 + $0x80] sm:$0xff]
  %v260 = vld [vmem:[%s3 + $0x88] sm:$0xff]
  %v261 = vld [vmem:[%s3 + $0x90] sm:$0xff]
  %v262 = vld [vmem:[%s3 + $0x98] sm:$0xff]
  %v263 = vld [vmem:[%s3 + $0xa0] sm:$0xff]
  %v264 = vld [vmem:[%s3 + $0xa8] sm:$0xff]
  %v265 = vld [vmem:[%s3 + $0xb0] sm:$0xff]
  %v266 = vld [vmem:[%s3 + $0xb8] sm:$0xff]
  %v267 = vld [vmem:[%s3 + $0xc0] sm:$0xff]
  %v268 = vld [vmem:[%s3 + $0xc8] sm:$0xff]
  %v269 = vld [vmem:[%s3 + $0xd0] sm:$0xff]
  %v270 = vld [vmem:[%s3 + $0xd8] sm:$0xff]
  %v271 = vld [vmem:[%s3 + $0xe0] sm:$0xff]
  %v272 = vld [vmem:[%s3 + $0xe8] sm:$0xff]
  %v273 = vld [vmem:[%s3 + $0xf0] sm:$0xff]
  %v274 = vld [vmem:[%s3 + $0xf8] sm:$0xff]
  %vm275 = vcmask 261120
  %v277 = vsel %vm275, %v242, 0
  %279 = vmatpush.msra.mxu0 0.0
  %280 = vmatpush.msra.mxu0 0.0
  %281 = vmatpush.msra.mxu0 0.0
  %282 = vmatpush.msra.mxu0 0.0
  %283 = vmatpush.msra.mxu0 0.0
  %284 = vmatpush.msra.mxu0 0.0
  %285 = vmatpush.msra.mxu0 0.0
  %286 = vmatpush.msra.mxu0 0.0
  %287 = vmatpush.msra.mxu0 0.0
  %288 = vmatpush.msra.mxu0 0.0
  %289 = vmatpush.msra.mxu0 0.0
  %290 = vmatpush.msra.mxu0 0.0
  %291 = vmatpush.msra.mxu0 %v267
  %292 = vmatpush.msra.mxu0 %v259
  %293 = vmatpush.msra.mxu0 %v251
  %294 = vmatpush.msra.mxu0 %v243
  %295 = vmatmul.f32.gmra.mxu0 %v277
  %v296 = vpop.f32.mrf.mxu0
  %v297 = vadd.f32 0.0, %v296
  %298 = vdwg.mxu0
  %299 = vmatpush.msra.mxu0 0.0
  %300 = vmatpush.msra.mxu0 0.0
  %301 = vmatpush.msra.mxu0 0.0
  %302 = vmatpush.msra.mxu0 0.0
  %303 = vmatpush.msra.mxu0 0.0
  %304 = vmatpush.msra.mxu0 0.0
  %305 = vmatpush.msra.mxu0 0.0
  %306 = vmatpush.msra.mxu0 0.0
  %307 = vmatpush.msra.mxu0 0.0
  %308 = vmatpush.msra.mxu0 0.0
  %309 = vmatpush.msra.mxu0 0.0
  %310 = vmatpush.msra.mxu0 0.0
  %311 = vmatpush.msra.mxu0 %v268
  %312 = vmatpush.msra.mxu0 %v260
  %313 = vmatpush.msra.mxu0 %v252
  %314 = vmatpush.msra.mxu0 %v244
  %315 = vmatmul.f32.gmra.mxu0 %v277
  %v316 = vpop.f32.mrf.mxu0
  %v317 = vadd.f32 0.0, %v316
  %318 = vdwg.mxu0
  %319 = vmatpush.msra.mxu0 0.0
  %320 = vmatpush.msra.mxu0 0.0
  %321 = vmatpush.msra.mxu0 0.0
  %322 = vmatpush.msra.mxu0 0.0
  %323 = vmatpush.msra.mxu0 0.0
  %324 = vmatpush.msra.mxu0 0.0
  %325 = vmatpush.msra.mxu0 0.0
  %326 = vmatpush.msra.mxu0 0.0
  %327 = vmatpush.msra.mxu0 0.0
  %328 = vmatpush.msra.mxu0 0.0
  %329 = vmatpush.msra.mxu0 0.0
  %330 = vmatpush.msra.mxu0 0.0
  %331 = vmatpush.msra.mxu0 %v269
  %332 = vmatpush.msra.mxu0 %v261
  %333 = vmatpush.msra.mxu0 %v253
  %334 = vmatpush.msra.mxu0 %v245
  %335 = vmatmul.f32.gmra.mxu0 %v277
  %v336 = vpop.f32.mrf.mxu0
  %v337 = vadd.f32 0.0, %v336
  %338 = vdwg.mxu0
  %339 = vmatpush.msra.mxu0 0.0
  %340 = vmatpush.msra.mxu0 0.0
  %341 = vmatpush.msra.mxu0 0.0
  %342 = vmatpush.msra.mxu0 0.0
  %343 = vmatpush.msra.mxu0 0.0
  %344 = vmatpush.msra.mxu0 0.0
  %345 = vmatpush.msra.mxu0 0.0
  %346 = vmatpush.msra.mxu0 0.0
  %347 = vmatpush.msra.mxu0 0.0
  %348 = vmatpush.msra.mxu0 0.0
  %349 = vmatpush.msra.mxu0 0.0
  %350 = vmatpush.msra.mxu0 0.0
  %351 = vmatpush.msra.mxu0 %v270
  %352 = vmatpush.msra.mxu0 %v262
  %353 = vmatpush.msra.mxu0 %v254
  %354 = vmatpush.msra.mxu0 %v246
  %355 = vmatmul.f32.gmra.mxu0 %v277
  %v356 = vpop.f32.mrf.mxu0
  %v357 = vadd.f32 0.0, %v356
  %358 = vdwg.mxu0
  %359 = vmatpush.msra.mxu0 0.0
  %360 = vmatpush.msra.mxu0 0.0
  %361 = vmatpush.msra.mxu0 0.0
  %362 = vmatpush.msra.mxu0 0.0
  %363 = vmatpush.msra.mxu0 0.0
  %364 = vmatpush.msra.mxu0 0.0
  %365 = vmatpush.msra.mxu0 0.0
  %366 = vmatpush.msra.mxu0 0.0
  %367 = vmatpush.msra.mxu0 0.0
  %368 = vmatpush.msra.mxu0 0.0
  %369 = vmatpush.msra.mxu0 0.0
  %370 = vmatpush.msra.mxu0 0.0
  %371 = vmatpush.msra.mxu0 %v271
  %372 = vmatpush.msra.mxu0 %v263
  %373 = vmatpush.msra.mxu0 %v255
  %374 = vmatpush.msra.mxu0 %v247
  %375 = vmatmul.f32.gmra.mxu0 %v277
  %v376 = vpop.f32.mrf.mxu0
  %v377 = vadd.f32 0.0, %v376
  %378 = vdwg.mxu0
  %379 = vmatpush.msra.mxu0 0.0
  %380 = vmatpush.msra.mxu0 0.0
  %381 = vmatpush.msra.mxu0 0.0
  %382 = vmatpush.msra.mxu0 0.0
  %383 = vmatpush.msra.mxu0 0.0
  %384 = vmatpush.msra.mxu0 0.0
  %385 = vmatpush.msra.mxu0 0.0
  %386 = vmatpush.msra.mxu0 0.0
  %387 = vmatpush.msra.mxu0 0.0
  %388 = vmatpush.msra.mxu0 0.0
  %389 = vmatpush.msra.mxu0 0.0
  %390 = vmatpush.msra.mxu0 0.0
  %391 = vmatpush.msra.mxu0 %v272
  %392 = vmatpush.msra.mxu0 %v264
  %393 = vmatpush.msra.mxu0 %v256
  %394 = vmatpush.msra.mxu0 %v248
  %395 = vmatmul.f32.gmra.mxu0 %v277
  %v396 = vpop.f32.mrf.mxu0
  %v397 = vadd.f32 0.0, %v396
  %398 = vdwg.mxu0
  %399 = vmatpush.msra.mxu0 0.0
  %400 = vmatpush.msra.mxu0 0.0
  %401 = vmatpush.msra.mxu0 0.0
  %402 = vmatpush.msra.mxu0 0.0
  %403 = vmatpush.msra.mxu0 0.0
  %404 = vmatpush.msra.mxu0 0.0
  %405 = vmatpush.msra.mxu0 0.0
  %406 = vmatpush.msra.mxu0 0.0
  %407 = vmatpush.msra.mxu0 0.0
  %408 = vmatpush.msra.mxu0 0.0
  %409 = vmatpush.msra.mxu0 0.0
  %410 = vmatpush.msra.mxu0 0.0
  %411 = vmatpush.msra.mxu0 %v273
  %412 = vmatpush.msra.mxu0 %v265
  %413 = vmatpush.msra.mxu0 %v257
  %414 = vmatpush.msra.mxu0 %v249
  %415 = vmatmul.f32.gmra.mxu0 %v277
  %v416 = vpop.f32.mrf.mxu0
  %v417 = vadd.f32 0.0, %v416
  %418 = vdwg.mxu0
  %419 = vmatpush.msra.mxu0 0.0
  %420 = vmatpush.msra.mxu0 0.0
  %421 = vmatpush.msra.mxu0 0.0
  %422 = vmatpush.msra.mxu0 0.0
  %423 = vmatpush.msra.mxu0 0.0
  %424 = vmatpush.msra.mxu0 0.0
  %425 = vmatpush.msra.mxu0 0.0
  %426 = vmatpush.msra.mxu0 0.0
  %427 = vmatpush.msra.mxu0 0.0
  %428 = vmatpush.msra.mxu0 0.0
  %429 = vmatpush.msra.mxu0 0.0
  %430 = vmatpush.msra.mxu0 0.0
  %431 = vmatpush.msra.mxu0 %v274
  %432 = vmatpush.msra.mxu0 %v266
  %433 = vmatpush.msra.mxu0 %v258
  %434 = vmatpush.msra.mxu0 %v250
  %435 = vmatmul.f32.gmra.mxu0 %v277
  %v436 = vpop.f32.mrf.mxu0
  %v437 = vadd.f32 0.0, %v436
  %438 = vdwg.mxu0
  %v439 = vld [vmem:[%s4] ss:$2 sm:$0xff]
  %v441 = vperm.slane %v439, 0
  %v442 = vperm.slane %v439, 1
  %v443 = vperm.slane %v439, 2
  %v444 = vperm.slane %v439, 3
  %v445 = vperm.slane %v439, 4
  %v446 = vperm.slane %v439, 5
  %v447 = vperm.slane %v439, 6
  %v448 = vperm.slane %v439, 7
  %v457 = vmul.f32 %v297, %v441
  %v458 = vmul.f32 %v317, %v442
  %v459 = vmul.f32 %v337, %v443
  %v460 = vmul.f32 %v357, %v444
  %v461 = vmul.f32 %v377, %v445
  %v462 = vmul.f32 %v397, %v446
  %v463 = vmul.f32 %v417, %v447
  %v464 = vmul.f32 %v437, %v448
  %v473 = vrot.slane %v458, 6
  %v474 = vrot.slane %v459, 4
  %v475 = vrot.slane %v460, 2
  %v476 = vrot.slane %v462, 6
  %v477 = vrot.slane %v463, 4
  %v478 = vrot.slane %v464, 2
  %vm479 = vcmask 1041408
  %v480 = vsel %vm479, %v457, %v473
  %vm481 = vcmask 1045508
  %v482 = vsel %vm481, %v474, %v475
  %vm483 = vcmask 1043456
  %v484 = vsel %vm483, %v480, %v482
  %v485 = vsel %vm479, %v461, %v476
  %v486 = vsel %vm481, %v477, %v478
  %v487 = vsel %vm483, %v485, %v486
  %490 = vst [vmem:[%s5] sm:$0xff] %v484
  %491 = vst [vmem:[%s5 + $0x8] sm:$0xff] %v487
  %s492 = scalar_lea.vmem %s4, 1
  %v493 = vld [vmem:[%s492] ss:$2 sm:$0xff]
  %v495 = vperm.slane %v493, 0
  %v496 = vperm.slane %v493, 1
  %v497 = vperm.slane %v493, 2
  %v498 = vperm.slane %v493, 3
  %v499 = vperm.slane %v493, 4
  %v500 = vperm.slane %v493, 5
  %v501 = vperm.slane %v493, 6
  %v502 = vperm.slane %v493, 7
  %v511 = vmul.f32 %v297, %v495
  %v512 = vmul.f32 %v317, %v496
  %v513 = vmul.f32 %v337, %v497
  %v514 = vmul.f32 %v357, %v498
  %v515 = vmul.f32 %v377, %v499
  %v516 = vmul.f32 %v397, %v500
  %v517 = vmul.f32 %v417, %v501
  %v518 = vmul.f32 %v437, %v502
  %v527 = vrot.slane %v512, 6
  %v528 = vrot.slane %v513, 4
  %v529 = vrot.slane %v514, 2
  %v530 = vrot.slane %v516, 6
  %v531 = vrot.slane %v517, 4
  %v532 = vrot.slane %v518, 2
  %v533 = vsel %vm479, %v511, %v527
  %v534 = vsel %vm481, %v528, %v529
  %v535 = vsel %vm483, %v533, %v534
  %v536 = vsel %vm479, %v515, %v530
  %v537 = vsel %vm481, %v531, %v532
  %v538 = vsel %vm483, %v536, %v537
  %541 = vst [vmem:[%s6] sm:$0xff] %v535
  %542 = vst [vmem:[%s6 + $0x8] sm:$0xff] %v538
  // Predicated region
  $region26: #{_cosine_sine_basis_impl.1} parent=0 // pred_check
    _
  $region27: #{_cosine_sine_basis_impl.1} parent=0 // pred_check_branch
    %544 = sbr.rel (0) target = $region29
  $region28: #{_cosine_sine_basis_impl.1} parent=0 // pred_region
    _
  $region29: #{_cosine_sine_basis_impl.1} parent=0 // pred_fallthru
    _
  // Predicated region
  $region30: #{_cosine_sine_basis_impl.1} parent=0 // pred_check
    _
  $region31: #{_cosine_sine_basis_impl.1} parent=0 // pred_check_branch
    %546 = sbr.rel (0) target = $region33
  $region32: #{_cosine_sine_basis_impl.1} parent=0 // pred_region
    _
  $region33: #{_cosine_sine_basis_impl.1} parent=0 // pred_fallthru
    _
  // Predicated region
  $region34: #{_cosine_sine_basis_impl.1} parent=0 // pred_check
    _
  $region35: #{_cosine_sine_basis_impl.1} parent=0 // pred_check_branch
    %548 = sbr.rel (0) target = $region37
  $region36: #{_cosine_sine_basis_impl.1} parent=0 // pred_region
    _
  $region37: #{_cosine_sine_basis_impl.1} parent=0 // pred_fallthru
    _
  // Predicated region
  $region38: #{_cosine_sine_basis_impl.1} parent=0 // pred_check
    _
  $region39: #{_cosine_sine_basis_impl.1} parent=0 // pred_check_branch
    %550 = sbr.rel (0) target = $region41
  $region40: #{_cosine_sine_basis_impl.1} parent=0 // pred_region
    _
  $region41: #{_cosine_sine_basis_impl.1} parent=0 // pred_fallthru
    _

// kernel: _cosine_sine_basis_impl.1
$region0: #{_cosine_sine_basis_impl.1}
  #allocation0 [shape = 'u32[]', space=smem, size = 0x4, offset = 0x4, fixed_abs, tag = 'smem constant byte address 0x4 - core index']
  #allocation1 [shape = 'u32[72,128]{1,0:T(1,128)}', space=vmem, size = 0x9000, scoped, tag = 'internal scratch']
  #allocation2 [shape = 'f32[2,32]{1,0:T(2,128)}', space=vmem, size = 0x400, scoped, tag = 'scratch operand']
  %s0 = inlined_call_operand.vmem [shape: f32[2,8,32], index: 0, kind: input, shape index: {}]
  %s1 = inlined_call_operand.vmem [shape: f32[32,384], index: 1, kind: input, shape index: {}]
  %s2 = inlined_call_operand.vmem [shape: f32[1,384], index: 2, kind: input, shape index: {}]
  %s3 = inlined_call_operand.vmem [shape: f32[32,1024], index: 3, kind: input, shape index: {}]
  %s4 = inlined_call_operand.vmem [shape: f32[2,1024], index: 4, kind: input, shape index: {}]
  %s5 = inlined_call_operand.vmem [shape: f32[2,1024], index: 5, kind: output, shape index: {0}]
  %s6 = inlined_call_operand.vmem [shape: f32[2,1024], index: 6, kind: output, shape index: {1}]
  %7 = xla_tuple %s5, %s6
  %s8 = sld [smem:[#allocation0]]
  $region42: #{_cosine_sine_basis_impl.1} parent=0
    _
  %s10 = ssub.s32 1, %s8
  %s11 = scalar_select 0, %s10, %s8
  // Predicated region
  $region2: #{_cosine_sine_basis_impl.1} parent=0 // pred_check
    _
  $region3: #{_cosine_sine_basis_impl.1} parent=0 // pred_check_branch
    %13 = sbr.rel (0) target = $region5
  $region4: #{_cosine_sine_basis_impl.1} parent=0 // pred_region
    _
  $region5: #{_cosine_sine_basis_impl.1} parent=0 // pred_fallthru
    _
  // Predicated region
  $region6: #{_cosine_sine_basis_impl.1} parent=0 // pred_check
    _
  $region7: #{_cosine_sine_basis_impl.1} parent=0 // pred_check_branch
    %15 = sbr.rel (0) target = $region9
  $region8: #{_cosine_sine_basis_impl.1} parent=0 // pred_region
    _
  $region9: #{_cosine_sine_basis_impl.1} parent=0 // pred_fallthru
    _
  // Predicated region
  $region10: #{_cosine_sine_basis_impl.1} parent=0 // pred_check
    _
  $region11: #{_cosine_sine_basis_impl.1} parent=0 // pred_check_branch
    %17 = sbr.rel (0) target = $region13
  $region12: #{_cosine_sine_basis_impl.1} parent=0 // pred_region
    _
  $region13: #{_cosine_sine_basis_impl.1} parent=0 // pred_fallthru
    _
  // Predicated region
  $region14: #{_cosine_sine_basis_impl.1} parent=0 // pred_check
    _
  $region15: #{_cosine_sine_basis_impl.1} parent=0 // pred_check_branch
    %19 = sbr.rel (0) target = $region17
  $region16: #{_cosine_sine_basis_impl.1} parent=0 // pred_region
    _
  $region17: #{_cosine_sine_basis_impl.1} parent=0 // pred_fallthru
    _
  // Predicated region
  $region18: #{_cosine_sine_basis_impl.1} parent=0 // pred_check
    _
  $region19: #{_cosine_sine_basis_impl.1} parent=0 // pred_check_branch
    %21 = sbr.rel (0) target = $region21
  $region20: #{_cosine_sine_basis_impl.1} parent=0 // pred_region
    _
  $region21: #{_cosine_sine_basis_impl.1} parent=0 // pred_fallthru
    _
  %p22 = scmp.eq.s32.totalorder 0, 0
  // Predicated region
  $region22: #{_cosine_sine_basis_impl.1} parent=0 // pred_check
    %p23 = pneg %p22
  $region23: #{_cosine_sine_basis_impl.1} parent=0 // pred_check_branch
    %25 = sbr.rel (%p23) target = $region25
  $region24: #{_cosine_sine_basis_impl.1} parent=0 // pred_region
    %v26 = vld [vmem:[%s0] sm:$0xff]
    %v27 = vld [vmem:[%s0 + $0x8] sm:$0xff]
    %v28 = vld [vmem:[%s1] sm:$0xff]
    %v29 = vld [vmem:[%s1 + $0x8] sm:$0xff]
    %v30 = vld [vmem:[%s1 + $0x10] sm:$0xff]
    %v31 = vld [vmem:[%s1 + $0x18] sm:$0xff]
    %v32 = vld [vmem:[%s1 + $0x20] sm:$0xff]
    %v33 = vld [vmem:[%s1 + $0x28] sm:$0xff]
    %v34 = vld [vmem:[%s1 + $0x30] sm:$0xff]
    %v35 = vld [vmem:[%s1 + $0x38] sm:$0xff]
    %v36 = vld [vmem:[%s1 + $0x40] sm:$0xff]
    %v37 = vld [vmem:[%s1 + $0x48] sm:$0xff]
    %v38 = vld [vmem:[%s1 + $0x50] sm:$0xff]
    %v39 = vld [vmem:[%s1 + $0x58] sm:$0xff]
    %v40 = vld [vmem:[%s2] sm:$0x7]
    %v42 = vperm.slane %v40, 0
    %v43 = vperm.slane %v40, 1
    %v44 = vperm.slane %v40, 2
    %vm48 = vcmask 261120
    %v50 = vsel %vm48, %v26, 0
    %v53 = vsel %vm48, %v27, 0
    %55 = vmatpush.msra.mxu0 0.0
    %56 = vmatpush.msra.mxu0 0.0
    %57 = vmatpush.msra.mxu0 0.0
    %58 = vmatpush.msra.mxu0 0.0
    %59 = vmatpush.msra.mxu0 0.0
    %60 = vmatpush.msra.mxu0 0.0
    %61 = vmatpush.msra.mxu0 0.0
    %62 = vmatpush.msra.mxu0 0.0
    %63 = vmatpush.msra.mxu0 0.0
    %64 = vmatpush.msra.mxu0 0.0
    %65 = vmatpush.msra.mxu0 0.0
    %66 = vmatpush.msra.mxu0 0.0
    %67 = vmatpush.msra.mxu0 %v37
    %68 = vmatpush.msra.mxu0 %v34
    %69 = vmatpush.msra.mxu0 %v31
    %70 = vmatpush.msra.mxu0 %v28
    %71 = vmatmul.f32.gmra.mxu0 %v50
    %v72 = vpop.f32.mrf.mxu0
    %v73 = vadd.f32 %v42, %v72
    %74 = vmatmul.f32.gmra.mxu0 %v53
    %v75 = vpop.f32.mrf.mxu0
    %v76 = vadd.f32 %v42, %v75
    %77 = vdwg.mxu0
    %78 = vmatpush.msra.mxu0 0.0
    %79 = vmatpush.msra.mxu0 0.0
    %80 = vmatpush.msra.mxu0 0.0
    %81 = vmatpush.msra.mxu0 0.0
    %82 = vmatpush.msra.mxu0 0.0
    %83 = vmatpush.msra.mxu0 0.0
    %84 = vmatpush.msra.mxu0 0.0
    %85 = vmatpush.msra.mxu0 0.0
    %86 = vmatpush.msra.mxu0 0.0
    %87 = vmatpush.msra.mxu0 0.0
    %88 = vmatpush.msra.mxu0 0.0
    %89 = vmatpush.msra.mxu0 0.0
    %90 = vmatpush.msra.mxu0 %v38
    %91 = vmatpush.msra.mxu0 %v35
    %92 = vmatpush.msra.mxu0 %v32
    %93 = vmatpush.msra.mxu0 %v29
    %94 = vmatmul.f32.gmra.mxu0 %v50
    %v95 = vpop.f32.mrf.mxu0
    %v96 = vadd.f32 %v43, %v95
    %97 = vmatmul.f32.gmra.mxu0 %v53
    %v98 = vpop.f32.mrf.mxu0
    %v99 = vadd.f32 %v43, %v98
    %100 = vdwg.mxu0
    %101 = vmatpush.msra.mxu0 0.0
    %102 = vmatpush.msra.mxu0 0.0
    %103 = vmatpush.msra.mxu0 0.0
    %104 = vmatpush.msra.mxu0 0.0
    %105 = vmatpush.msra.mxu0 0.0
    %106 = vmatpush.msra.mxu0 0.0
    %107 = vmatpush.msra.mxu0 0.0
    %108 = vmatpush.msra.mxu0 0.0
    %109 = vmatpush.msra.mxu0 0.0
    %110 = vmatpush.msra.mxu0 0.0
    %111 = vmatpush.msra.mxu0 0.0
    %112 = vmatpush.msra.mxu0 0.0
    %113 = vmatpush.msra.mxu0 %v39
    %114 = vmatpush.msra.mxu0 %v36
    %115 = vmatpush.msra.mxu0 %v33
    %116 = vmatpush.msra.mxu0 %v30
    %117 = vmatmul.f32.gmra.mxu0 %v50
    %v118 = vpop.f32.mrf.mxu0
    %v119 = vadd.f32 %v44, %v118
    %120 = vmatmul.f32.gmra.mxu0 %v53
    %v121 = vpop.f32.mrf.mxu0
    %v122 = vadd.f32 %v44, %v121
    %123 = vdwg.mxu0
    %v124 = vsel %vm48, %v73, 0.0
    %v125 = vrot.slane %v124, 4
    %v126 = vadd.f32 %v124, %v125
    %v127 = vrot.slane %v126, 2
    %v128 = vadd.f32 %v126, %v127
    %v129 = vrot.slane %v128, 1
    %v130 = vadd.f32 %v128, %v129
    %v131 = vsel %vm48, %v76, 0.0
    %v132 = vrot.slane %v131, 4
    %v133 = vadd.f32 %v131, %v132
    %v134 = vrot.slane %v133, 2
    %v135 = vadd.f32 %v133, %v134
    %v136 = vrot.slane %v135, 1
    %v137 = vadd.f32 %v135, %v136
    %v138 = vrcp.pop 8.0
    %v139 = vmul.f32 8.0, %v138
    %v140 = vsub.f32 1.0, %v139
    %v141 = vmul.f32 %v138, %v140
    %v142 = vadd.f32 %v138, %v141
    %vm143 = vweird.f32 %v138
    %v144 = vsel %vm143, %v138, %v142
    %v145 = vmul.f32 %v130, %v144
    %v146 = vmul.f32 %v137, %v144
    %v147 = vmul.f32 %v96, %v145
    %v148 = vmul.f32 %v99, %v146
    %v149 = vsel %vm48, %v147, 0.0
    %150 = vadd.xlane.f32.xlu0 %v149
    %v151 = vpop.xlane.xlu0 %150
    %v152 = vsel %vm48, %v148, 0.0
    %153 = vadd.xlane.f32.xlu0 %v152
    %v154 = vpop.xlane.xlu0 %153
    %v155 = vmul.f32 %v151, 0.17677669
    %v156 = vmul.f32 %v154, 0.17677669
    %v157 = vrot.slane %v155, 4
    %v158 = vmax.f32 %v155, %v157
    %v159 = vrot.slane %v158, 2
    %v160 = vmax.f32 %v158, %v159
    %v161 = vrot.slane %v160, 1
    %v162 = vmax.f32 %v160, %v161
    %v163 = vrot.slane %v156, 4
    %v164 = vmax.f32 %v156, %v163
    %v165 = vrot.slane %v164, 2
    %v166 = vmax.f32 %v164, %v165
    %v167 = vrot.slane %v166, 1
    %v168 = vmax.f32 %v166, %v167
    %v169 = vsub.f32 %v155, %v162
    %v170 = vsub.f32 %v156, %v168
    %v171 = vmul.f32 %v169, 1.442695
    %v172 = vpow.pop %v171
    %v173 = vmul.f32 %v170, 1.442695
    %v174 = vpow.pop %v173
    %v175 = vrot.slane %v172, 4
    %v176 = vadd.f32 %v172, %v175
    %v177 = vrot.slane %v176, 2
    %v178 = vadd.f32 %v176, %v177
    %v179 = vrot.slane %v178, 1
    %v180 = vadd.f32 %v178, %v179
    %v181 = vrot.slane %v174, 4
    %v182 = vadd.f32 %v174, %v181
    %v183 = vrot.slane %v182, 2
    %v184 = vadd.f32 %v182, %v183
    %v185 = vrot.slane %v184, 1
    %v186 = vadd.f32 %v184, %v185
    %v187 = vrcp.pop %v180
    %v188 = vmul.f32 %v180, %v187
    %v189 = vsub.f32 1.0, %v188
    %v190 = vmul.f32 %v187, %v189
    %v191 = vadd.f32 %v187, %v190
    %vm192 = vweird.f32 %v180
    %vm193 = vweird.f32 %v187
    %vm194 = vmor %vm192, %vm193
    %v195 = vsel %vm194, %v187, %v191
    %v196 = vand.u32 2147483647, %v180
    %vm197 = vcmp.eq.f32.partialorder %v196, 8.507059e+37
    %v198 = vand.u32 %v180, 2147483648
    %v199 = vor.u32 1.1754944e-38, %v198
    %v200 = vsel %vm197, %v199, %v195
    %v201 = vmul.f32 %v172, %v200
    %v202 = vrcp.pop %v186
    %v203 = vmul.f32 %v186, %v202
    %v204 = vsub.f32 1.0, %v203
    %v205 = vmul.f32 %v202, %v204
    %v206 = vadd.f32 %v202, %v205
    %vm207 = vweird.f32 %v186
    %vm208 = vweird.f32 %v202
    %vm209 = vmor %vm207, %vm208
    %v210 = vsel %vm209, %v202, %v206
    %v211 = vand.u32 2147483647, %v186
    %vm212 = vcmp.eq.f32.partialorder %v211, 8.507059e+37
    %v213 = vand.u32 %v186, 2147483648
    %v214 = vor.u32 1.1754944e-38, %v213
    %v215 = vsel %vm212, %v214, %v210
    %v216 = vmul.f32 %v174, %v215
    %v217 = vmul.f32 %v201, %v119
    %v218 = vmul.f32 %v216, %v122
    %v219 = vsel %vm48, %v217, 0.0
    %v220 = vrot.slane %v219, 4
    %v221 = vadd.f32 %v219, %v220
    %v222 = vrot.slane %v221, 2
    %v223 = vadd.f32 %v221, %v222
    %v224 = vrot.slane %v223, 1
    %v225 = vadd.f32 %v223, %v224
    %v226 = vsel %vm48, %v218, 0.0
    %v227 = vrot.slane %v226, 4
    %v228 = vadd.f32 %v226, %v227
    %v229 = vrot.slane %v228, 2
    %v230 = vadd.f32 %v228, %v229
    %v231 = vrot.slane %v230, 1
    %v232 = vadd.f32 %v230, %v231
    %v233 = vmul.f32 %v225, %v144
    %v234 = vmul.f32 %v232, %v144
    %vm237 = vcmask 1041409
    %v238 = vsel %vm237, %v234, %v233
    %vm240 = vcmask 254976
    %241 = vst.msk [vmem:[#allocation2] sm:$0x3] %vm240, %v238
  $region25: #{_cosine_sine_basis_impl.1} parent=0 // pred_fallthru
    _
  %v242 = vld [vmem:[#allocation2] sm:$0x3]
  %v243 = vld [vmem:[%s3] sm:$0xff]
  %v244 = vld [vmem:[%s3 + $0x8] sm:$0xff]
  %v245 = vld [vmem:[%s3 + $0x10] sm:$0xff]
  %v246 = vld [vmem:[%s3 + $0x18] sm:$0xff]
  %v247 = vld [vmem:[%s3 + $0x20] sm:$0xff]
  %v248 = vld [vmem:[%s3 + $0x28] sm:$0xff]
  %v249 = vld [vmem:[%s3 + $0x30] sm:$0xff]
  %v250 = vld [vmem:[%s3 + $0x38] sm:$0xff]
  %v251 = vld [vmem:[%s3 + $0x40] sm:$0xff]
  %v252 = vld [vmem:[%s3 + $0x48] sm:$0xff]
  %v253 = vld [vmem:[%s3 + $0x50] sm:$0xff]
  %v254 = vld [vmem:[%s3 + $0x58] sm:$0xff]
  %v255 = vld [vmem:[%s3 + $0x60] sm:$0xff]
  %v256 = vld [vmem:[%s3 + $0x68] sm:$0xff]
  %v257 = vld [vmem:[%s3 + $0x70] sm:$0xff]
  %v258 = vld [vmem:[%s3 + $0x78] sm:$0xff]
  %v259 = vld [vmem:[%s3 + $0x80] sm:$0xff]
  %v260 = vld [vmem:[%s3 + $0x88] sm:$0xff]
  %v261 = vld [vmem:[%s3 + $0x90] sm:$0xff]
  %v262 = vld [vmem:[%s3 + $0x98] sm:$0xff]
  %v263 = vld [vmem:[%s3 + $0xa0] sm:$0xff]
  %v264 = vld [vmem:[%s3 + $0xa8] sm:$0xff]
  %v265 = vld [vmem:[%s3 + $0xb0] sm:$0xff]
  %v266 = vld [vmem:[%s3 + $0xb8] sm:$0xff]
  %v267 = vld [vmem:[%s3 + $0xc0] sm:$0xff]
  %v268 = vld [vmem:[%s3 + $0xc8] sm:$0xff]
  %v269 = vld [vmem:[%s3 + $0xd0] sm:$0xff]
  %v270 = vld [vmem:[%s3 + $0xd8] sm:$0xff]
  %v271 = vld [vmem:[%s3 + $0xe0] sm:$0xff]
  %v272 = vld [vmem:[%s3 + $0xe8] sm:$0xff]
  %v273 = vld [vmem:[%s3 + $0xf0] sm:$0xff]
  %v274 = vld [vmem:[%s3 + $0xf8] sm:$0xff]
  %vm275 = vcmask 261120
  %v277 = vsel %vm275, %v242, 0
  %279 = vmatpush.msra.mxu0 0.0
  %280 = vmatpush.msra.mxu0 0.0
  %281 = vmatpush.msra.mxu0 0.0
  %282 = vmatpush.msra.mxu0 0.0
  %283 = vmatpush.msra.mxu0 0.0
  %284 = vmatpush.msra.mxu0 0.0
  %285 = vmatpush.msra.mxu0 0.0
  %286 = vmatpush.msra.mxu0 0.0
  %287 = vmatpush.msra.mxu0 0.0
  %288 = vmatpush.msra.mxu0 0.0
  %289 = vmatpush.msra.mxu0 0.0
  %290 = vmatpush.msra.mxu0 0.0
  %291 = vmatpush.msra.mxu0 %v267
  %292 = vmatpush.msra.mxu0 %v259
  %293 = vmatpush.msra.mxu0 %v251
  %294 = vmatpush.msra.mxu0 %v243
  %295 = vmatmul.f32.gmra.mxu0 %v277
  %v296 = vpop.f32.mrf.mxu0
  %v297 = vadd.f32 0.0, %v296
  %298 = vdwg.mxu0
  %299 = vmatpush.msra.mxu0 0.0
  %300 = vmatpush.msra.mxu0 0.0
  %301 = vmatpush.msra.mxu0 0.0
  %302 = vmatpush.msra.mxu0 0.0
  %303 = vmatpush.msra.mxu0 0.0
  %304 = vmatpush.msra.mxu0 0.0
  %305 = vmatpush.msra.mxu0 0.0
  %306 = vmatpush.msra.mxu0 0.0
  %307 = vmatpush.msra.mxu0 0.0
  %308 = vmatpush.msra.mxu0 0.0
  %309 = vmatpush.msra.mxu0 0.0
  %310 = vmatpush.msra.mxu0 0.0
  %311 = vmatpush.msra.mxu0 %v268
  %312 = vmatpush.msra.mxu0 %v260
  %313 = vmatpush.msra.mxu0 %v252
  %314 = vmatpush.msra.mxu0 %v244
  %315 = vmatmul.f32.gmra.mxu0 %v277
  %v316 = vpop.f32.mrf.mxu0
  %v317 = vadd.f32 0.0, %v316
  %318 = vdwg.mxu0
  %319 = vmatpush.msra.mxu0 0.0
  %320 = vmatpush.msra.mxu0 0.0
  %321 = vmatpush.msra.mxu0 0.0
  %322 = vmatpush.msra.mxu0 0.0
  %323 = vmatpush.msra.mxu0 0.0
  %324 = vmatpush.msra.mxu0 0.0
  %325 = vmatpush.msra.mxu0 0.0
  %326 = vmatpush.msra.mxu0 0.0
  %327 = vmatpush.msra.mxu0 0.0
  %328 = vmatpush.msra.mxu0 0.0
  %329 = vmatpush.msra.mxu0 0.0
  %330 = vmatpush.msra.mxu0 0.0
  %331 = vmatpush.msra.mxu0 %v269
  %332 = vmatpush.msra.mxu0 %v261
  %333 = vmatpush.msra.mxu0 %v253
  %334 = vmatpush.msra.mxu0 %v245
  %335 = vmatmul.f32.gmra.mxu0 %v277
  %v336 = vpop.f32.mrf.mxu0
  %v337 = vadd.f32 0.0, %v336
  %338 = vdwg.mxu0
  %339 = vmatpush.msra.mxu0 0.0
  %340 = vmatpush.msra.mxu0 0.0
  %341 = vmatpush.msra.mxu0 0.0
  %342 = vmatpush.msra.mxu0 0.0
  %343 = vmatpush.msra.mxu0 0.0
  %344 = vmatpush.msra.mxu0 0.0
  %345 = vmatpush.msra.mxu0 0.0
  %346 = vmatpush.msra.mxu0 0.0
  %347 = vmatpush.msra.mxu0 0.0
  %348 = vmatpush.msra.mxu0 0.0
  %349 = vmatpush.msra.mxu0 0.0
  %350 = vmatpush.msra.mxu0 0.0
  %351 = vmatpush.msra.mxu0 %v270
  %352 = vmatpush.msra.mxu0 %v262
  %353 = vmatpush.msra.mxu0 %v254
  %354 = vmatpush.msra.mxu0 %v246
  %355 = vmatmul.f32.gmra.mxu0 %v277
  %v356 = vpop.f32.mrf.mxu0
  %v357 = vadd.f32 0.0, %v356
  %358 = vdwg.mxu0
  %359 = vmatpush.msra.mxu0 0.0
  %360 = vmatpush.msra.mxu0 0.0
  %361 = vmatpush.msra.mxu0 0.0
  %362 = vmatpush.msra.mxu0 0.0
  %363 = vmatpush.msra.mxu0 0.0
  %364 = vmatpush.msra.mxu0 0.0
  %365 = vmatpush.msra.mxu0 0.0
  %366 = vmatpush.msra.mxu0 0.0
  %367 = vmatpush.msra.mxu0 0.0
  %368 = vmatpush.msra.mxu0 0.0
  %369 = vmatpush.msra.mxu0 0.0
  %370 = vmatpush.msra.mxu0 0.0
  %371 = vmatpush.msra.mxu0 %v271
  %372 = vmatpush.msra.mxu0 %v263
  %373 = vmatpush.msra.mxu0 %v255
  %374 = vmatpush.msra.mxu0 %v247
  %375 = vmatmul.f32.gmra.mxu0 %v277
  %v376 = vpop.f32.mrf.mxu0
  %v377 = vadd.f32 0.0, %v376
  %378 = vdwg.mxu0
  %379 = vmatpush.msra.mxu0 0.0
  %380 = vmatpush.msra.mxu0 0.0
  %381 = vmatpush.msra.mxu0 0.0
  %382 = vmatpush.msra.mxu0 0.0
  %383 = vmatpush.msra.mxu0 0.0
  %384 = vmatpush.msra.mxu0 0.0
  %385 = vmatpush.msra.mxu0 0.0
  %386 = vmatpush.msra.mxu0 0.0
  %387 = vmatpush.msra.mxu0 0.0
  %388 = vmatpush.msra.mxu0 0.0
  %389 = vmatpush.msra.mxu0 0.0
  %390 = vmatpush.msra.mxu0 0.0
  %391 = vmatpush.msra.mxu0 %v272
  %392 = vmatpush.msra.mxu0 %v264
  %393 = vmatpush.msra.mxu0 %v256
  %394 = vmatpush.msra.mxu0 %v248
  %395 = vmatmul.f32.gmra.mxu0 %v277
  %v396 = vpop.f32.mrf.mxu0
  %v397 = vadd.f32 0.0, %v396
  %398 = vdwg.mxu0
  %399 = vmatpush.msra.mxu0 0.0
  %400 = vmatpush.msra.mxu0 0.0
  %401 = vmatpush.msra.mxu0 0.0
  %402 = vmatpush.msra.mxu0 0.0
  %403 = vmatpush.msra.mxu0 0.0
  %404 = vmatpush.msra.mxu0 0.0
  %405 = vmatpush.msra.mxu0 0.0
  %406 = vmatpush.msra.mxu0 0.0
  %407 = vmatpush.msra.mxu0 0.0
  %408 = vmatpush.msra.mxu0 0.0
  %409 = vmatpush.msra.mxu0 0.0
  %410 = vmatpush.msra.mxu0 0.0
  %411 = vmatpush.msra.mxu0 %v273
  %412 = vmatpush.msra.mxu0 %v265
  %413 = vmatpush.msra.mxu0 %v257
  %414 = vmatpush.msra.mxu0 %v249
  %415 = vmatmul.f32.gmra.mxu0 %v277
  %v416 = vpop.f32.mrf.mxu0
  %v417 = vadd.f32 0.0, %v416
  %418 = vdwg.mxu0
  %419 = vmatpush.msra.mxu0 0.0
  %420 = vmatpush.msra.mxu0 0.0
  %421 = vmatpush.msra.mxu0 0.0
  %422 = vmatpush.msra.mxu0 0.0
  %423 = vmatpush.msra.mxu0 0.0
  %424 = vmatpush.msra.mxu0 0.0
  %425 = vmatpush.msra.mxu0 0.0
  %426 = vmatpush.msra.mxu0 0.0
  %427 = vmatpush.msra.mxu0 0.0
  %428 = vmatpush.msra.mxu0 0.0
  %429 = vmatpush.msra.mxu0 0.0
  %430 = vmatpush.msra.mxu0 0.0
  %431 = vmatpush.msra.mxu0 %v274
  %432 = vmatpush.msra.mxu0 %v266
  %433 = vmatpush.msra.mxu0 %v258
  %434 = vmatpush.msra.mxu0 %v250
  %435 = vmatmul.f32.gmra.mxu0 %v277
  %v436 = vpop.f32.mrf.mxu0
  %v437 = vadd.f32 0.0, %v436
  %438 = vdwg.mxu0
  %v439 = vld [vmem:[%s4] ss:$2 sm:$0xff]
  %v441 = vperm.slane %v439, 0
  %v442 = vperm.slane %v439, 1
  %v443 = vperm.slane %v439, 2
  %v444 = vperm.slane %v439, 3
  %v445 = vperm.slane %v439, 4
  %v446 = vperm.slane %v439, 5
  %v447 = vperm.slane %v439, 6
  %v448 = vperm.slane %v439, 7
  %v457 = vmul.f32 %v297, %v441
  %v458 = vmul.f32 %v317, %v442
  %v459 = vmul.f32 %v337, %v443
  %v460 = vmul.f32 %v357, %v444
  %v461 = vmul.f32 %v377, %v445
  %v462 = vmul.f32 %v397, %v446
  %v463 = vmul.f32 %v417, %v447
  %v464 = vmul.f32 %v437, %v448
  %v473 = vrot.slane %v458, 6
  %v474 = vrot.slane %v459, 4
  %v475 = vrot.slane %v460, 2
  %v476 = vrot.slane %v462, 6
  %v477 = vrot.slane %v463, 4
  %v478 = vrot.slane %v464, 2
  %vm479 = vcmask 1041408
  %v480 = vsel %vm479, %v457, %v473
  %vm481 = vcmask 1045508
  %v482 = vsel %vm481, %v474, %v475
  %vm483 = vcmask 1043456
  %v484 = vsel %vm483, %v480, %v482
  %v485 = vsel %vm479, %v461, %v476
  %v486 = vsel %vm481, %v477, %v478
  %v487 = vsel %vm483, %v485, %v486
  %490 = vst [vmem:[%s5] sm:$0xff] %v484
  %491 = vst [vmem:[%s5 + $0x8] sm:$0xff] %v487
  %s492 = scalar_lea.vmem %s4, 1
  %v493 = vld [vmem:[%s492] ss:$2 sm:$0xff]
  %v495 = vperm.slane %v493, 0
  %v496 = vperm.slane %v493, 1
  %v497 = vperm.slane %v493, 2
  %v498 = vperm.slane %v493, 3
  %v499 = vperm.slane %v493, 4
  %v500 = vperm.slane %v493, 5
  %v501 = vperm.slane %v493, 6
  %v502 = vperm.slane %v493, 7
  %v511 = vmul.f32 %v297, %v495
  %v512 = vmul.f32 %v317, %v496
  %v513 = vmul.f32 %v337, %v497
  %v514 = vmul.f32 %v357, %v498
  %v515 = vmul.f32 %v377, %v499
  %v516 = vmul.f32 %v397, %v500
  %v517 = vmul.f32 %v417, %v501
  %v518 = vmul.f32 %v437, %v502
  %v527 = vrot.slane %v512, 6
  %v528 = vrot.slane %v513, 4
  %v529 = vrot.slane %v514, 2
  %v530 = vrot.slane %v516, 6
  %v531 = vrot.slane %v517, 4
  %v532 = vrot.slane %v518, 2
  %v533 = vsel %vm479, %v511, %v527
  %v534 = vsel %vm481, %v528, %v529
  %v535 = vsel %vm483, %v533, %v534
  %v536 = vsel %vm479, %v515, %v530
  %v537 = vsel %vm481, %v531, %v532
  %v538 = vsel %vm483, %v536, %v537
  %541 = vst [vmem:[%s6] sm:$0xff] %v535
  %542 = vst [vmem:[%s6 + $0x8] sm:$0xff] %v538
  // Predicated region
  $region26: #{_cosine_sine_basis_impl.1} parent=0 // pred_check
    _
  $region27: #{_cosine_sine_basis_impl.1} parent=0 // pred_check_branch
    %544 = sbr.rel (0) target = $region29
  $region28: #{_cosine_sine_basis_impl.1} parent=0 // pred_region
    _
  $region29: #{_cosine_sine_basis_impl.1} parent=0 // pred_fallthru
    _
  // Predicated region
  $region30: #{_cosine_sine_basis_impl.1} parent=0 // pred_check
    _
  $region31: #{_cosine_sine_basis_impl.1} parent=0 // pred_check_branch
    %546 = sbr.rel (0) target = $region33
  $region32: #{_cosine_sine_basis_impl.1} parent=0 // pred_region
    _
  $region33: #{_cosine_sine_basis_impl.1} parent=0 // pred_fallthru
    _
  // Predicated region
  $region34: #{_cosine_sine_basis_impl.1} parent=0 // pred_check
    _
  $region35: #{_cosine_sine_basis_impl.1} parent=0 // pred_check_branch
    %548 = sbr.rel (0) target = $region37
  $region36: #{_cosine_sine_basis_impl.1} parent=0 // pred_region
    _
  $region37: #{_cosine_sine_basis_impl.1} parent=0 // pred_fallthru
    _
  // Predicated region
  $region38: #{_cosine_sine_basis_impl.1} parent=0 // pred_check
    _
  $region39: #{_cosine_sine_basis_impl.1} parent=0 // pred_check_branch
    %550 = sbr.rel (0) target = $region41
  $region40: #{_cosine_sine_basis_impl.1} parent=0 // pred_region
    _
  $region41: #{_cosine_sine_basis_impl.1} parent=0 // pred_fallthru
    _

</llo_original>
